<compile_context>
chip_gen: v7x
topology: tpu7x:2x2x1
jax: 0.10.0
libtpu: 0.0.40
codegen_flags: <defaults>
</compile_context>

<pallas_src>
import functools

import jax
import jax.numpy as jnp
import numpy as np
from jax.experimental import pallas as pl
from jax.experimental.pallas import tpu as pltpu

N_P = 2          # number of 'P' nodes (fixed by the module's reshape((2, -1)))
N_A = 1          # number of 'A' nodes (fixed by the module's reshape((1, -1)))
L_ALPHA = 0.2    # LeakyReLU negative slope
PAD_ROWS = 8     # N_P + N_A padded to one sublane tile


def _leaky_relu(x):
    return jnp.where(x > 0, x, L_ALPHA * x)


# --------------------------------------------------------------------------- #
# Kernel
# --------------------------------------------------------------------------- #
def _hetgat_fused_kernel(lhs_ref, rhs_ref, out_ref, *, slab):
    """Single-invocation fused HetGAT forward for the fixed 2-P / 1-A graph.

    lhs_ref: (8, C)       packed [feat_P rows | feat_A row | zero pad] + ones col
    rhs_ref: (C, 5*slab)  block-diagonal fused weights+biases+attention dots
    out_ref: (8, slab)    lane-dense slab [out_P lanes | out_A lanes | zero pad]
    """
    f32 = jnp.float32

    # ONE block-diagonal MXU matmul: 6 per-edge-type projections (all heads),
    # both node-type biases (ones column of lhs), and all 4 attention dot
    # products (head-expanded, chained into the RHS at prep time).
    full = jnp.dot(lhs_ref[...], rhs_ref[...], preferred_element_type=f32)

    # 128-aligned, lane-dense slabs. Column layout within each slab:
    # [P-node lanes (H*dP) | A-node lanes (H*dA) | zero pad]
    s_self = full[:, 0 * slab:1 * slab]   # [Wh_P   | Wh_A  ]   destination self term
    s_msg  = full[:, 1 * slab:2 * slab]   # [Wh_p2p | Wh_p2a]   messages from P sources
    s_rcv  = full[:, 2 * slab:3 * slab]   # [Wh_a2p | Wh_a2a]   messages from the A source
    e_dst  = full[:, 3 * slab:4 * slab]   # dst-half attention dots (head-expanded)
    e_src  = full[:, 4 * slab:5 * slab]   # src-half attention dots (head-expanded)

    # GAT logits for the two P sources (rows 0 and 1), head-vectorized.
    z0 = _leaky_relu(e_dst + e_src[0:1, :])
    z1 = _leaky_relu(e_dst + e_src[1:2, :])
    # Softmax over 2 sources == sigmoid of the logit difference:
    # one exp + one reciprocal (EUP) for the entire slab.
    alpha0 = pl.reciprocal(1.0 + jnp.exp(z1 - z0), approx=True)
    alpha1 = 1.0 - alpha0
    agg = alpha0 * s_msg[0:1, :] + alpha1 * s_msg[1:2, :]

    # a2p / a2a: exactly one incoming edge per destination (N_A == 1), so the
    # mailbox softmax is identically 1 and attn_fc_a2p / attn_fc_a2a cancel;
    # the aggregate is just the A-row message, broadcast to every destination.
    rcv = s_rcv[N_P:N_P + 1, :]

    # use_relu=True (merge='cat'):  h' = ReLU(Wh_self + h_recv_attn + h_recv_single)
    out_ref[...] = jnp.maximum(s_self + agg + rcv, 0.0)


# --------------------------------------------------------------------------- #
# One-time parameter fusion (hoisted out of the per-forward path)
# --------------------------------------------------------------------------- #
def _heads_to_lanes(x):
    """(H, r, d) -> (r, H*d): head blocks laid consecutively along lanes."""
    h, r, d = x.shape
    return jnp.transpose(x, (1, 0, 2)).reshape(r, h * d)


def _attn_expand(a_half):
    """(H, d) -> (H*d, H*d) block-diag 'dot + lane-expand' matrix.

    (X @ M)[n, h*d + j] = <X[n, h*d:(h+1)*d], a_half[h]>  for every j in the block,
    i.e. the per-head attention dot product, already repeated across the head's lanes.
    """
    h, d = a_half.shape
    blocks = [jnp.broadcast_to(a_half[i][:, None], (d, d)) for i in range(h)]
    return jax.scipy.linalg.block_diag(*blocks)


def fuse_params(params, num_heads):
    """Build the (C, 5*slab) block-diagonal RHS. Called ONCE, not per forward."""
    in_p, d_p = params["w_p"].shape[1], params["w_p"].shape[2]
    in_a, d_a = params["w_a"].shape[1], params["w_a"].shape[2]
    hp, ha = num_heads * d_p, num_heads * d_a
    slab = ((hp + ha + 127) // 128) * 128          # lane-aligned slab width
    c_bias = in_p + in_a                           # ones column folds both biases
    c = ((c_bias + 1 + 7) // 8) * 8                # contraction dim, sublane-padded

    def col(w_mat, b_mat, row_lo):
        """(C, width) column block: weights at their input rows, bias in the ones row."""
        width = w_mat.shape[1]
        blk = jnp.zeros((c, width), jnp.float32)
        blk = blk.at[row_lo:row_lo + w_mat.shape[0], :].set(w_mat)
        blk = blk.at[c_bias, :].set(b_mat[0])
        return blk

    wp, bp = _heads_to_lanes(params["w_p"]), _heads_to_lanes(params["b_p"])
    wa, ba = _heads_to_lanes(params["w_a"]), _heads_to_lanes(params["b_a"])
    wp2p, bp2p = _heads_to_lanes(params["w_p2p"]), _heads_to_lanes(params["b_p2p"])
    wp2a, bp2a = _heads_to_lanes(params["w_p2a"]), _heads_to_lanes(params["b_p2a"])
    wa2p, ba2p = _heads_to_lanes(params["w_a2p"]), _heads_to_lanes(params["b_a2p"])
    wa2a, ba2a = _heads_to_lanes(params["w_a2a"]), _heads_to_lanes(params["b_a2a"])

    # Block-diagonal over node types (P inputs at rows 0:in_p, A at in_p:in_p+in_a).
    blk_self_p = col(wp, bp, 0)                  # Wh_P
    blk_self_a = col(wa, ba, in_p)               # Wh_A
    blk_msg_p = col(wp2p, bp2p, 0)               # Wh_p2p (P sources)
    blk_msg_a = col(wp2a, bp2a, 0)               # Wh_p2a (P sources)
    blk_rcv_p = col(wa2p, ba2p, in_p)            # Wh_a2p (A source)
    blk_rcv_a = col(wa2a, ba2a, in_p)            # Wh_a2a (A source)

    # Chain the attention dot products into the SAME matmul at prep time:
    # lhs @ (W_block @ M) == (lhs @ W_block) @ M == Wh @ attn_vec, head-expanded.
    m_p2p_src = _attn_expand(params["a_p2p"][:, 0, :])
    m_p2p_dst = _attn_expand(params["a_p2p"][:, 1, :])
    m_p2a_src = _attn_expand(params["a_p2a"][:, 0, :])
    m_p2a_dst = _attn_expand(params["a_p2a"][:, 1, :])
    blk_edst_p = blk_self_p @ m_p2p_dst
    blk_edst_a = blk_self_a @ m_p2a_dst
    blk_esrc_p = blk_msg_p @ m_p2p_src
    blk_esrc_a = blk_msg_a @ m_p2a_src
    # attn_fc_a2p / attn_fc_a2a never appear (single-edge softmax == 1 for N_A == 1).

    def slab_cat(p_blk, a_blk):
        pad = slab - (hp + ha)
        return jnp.concatenate(
            [p_blk, a_blk, jnp.zeros((c, pad), jnp.float32)], axis=1)

    rhs = jnp.concatenate([
        slab_cat(blk_self_p, blk_self_a),   # slab 0: Wh_P   | Wh_A
        slab_cat(blk_msg_p, blk_msg_a),     # slab 1: Wh_p2p | Wh_p2a
        slab_cat(blk_rcv_p, blk_rcv_a),     # slab 2: Wh_a2p | Wh_a2a
        slab_cat(blk_edst_p, blk_edst_a),   # slab 3: dst-half attention dots
        slab_cat(blk_esrc_p, blk_esrc_a),   # slab 4: src-half attention dots
    ], axis=1)                              # (C, 5*slab)

    meta = dict(in_p=in_p, in_a=in_a, hp=hp, ha=ha, slab=slab,
                c=c, c_bias=c_bias)
    return rhs, meta


# --------------------------------------------------------------------------- #
# Forward wrapper (jitted; parameter fusion already hoisted)
# --------------------------------------------------------------------------- #
def make_forward(params, num_heads):
    rhs, meta = fuse_params(params, num_heads)
    in_p, in_a = meta["in_p"], meta["in_a"]
    hp, ha = meta["hp"], meta["ha"]
    slab, c, c_bias = meta["slab"], meta["c"], meta["c_bias"]

    kernel = functools.partial(_hetgat_fused_kernel, slab=slab)
    cost = pl.CostEstimate(
        flops=2 * PAD_ROWS * c * 5 * slab + 16 * PAD_ROWS * slab,
        transcendentals=2 * PAD_ROWS * slab,
        bytes_accessed=4 * (PAD_ROWS * c + c * 5 * slab + PAD_ROWS * slab))

    call = pl.pallas_call(
        kernel,
        out_shape=jax.ShapeDtypeStruct((PAD_ROWS, slab), jnp.float32),
        in_specs=[pl.BlockSpec(memory_space=pltpu.MemorySpace.VMEM),
                  pl.BlockSpec(memory_space=pltpu.MemorySpace.VMEM)],
        out_specs=pl.BlockSpec(memory_space=pltpu.MemorySpace.VMEM),
        cost_estimate=cost,
    )

    @jax.jit
    def forward(feat_p, feat_a):
        n_p, n_a = feat_p.shape[0], feat_a.shape[0]
        if n_p != N_P or n_a != N_A:
            # The a2p/a2a single-edge shortcut and the module's reshape((2,-1)) /
            # reshape((1,-1)) hard-code 2 'P' nodes and 1 'A' node.
            raise ValueError(f"expected {N_P} P nodes and {N_A} A node, got {n_p}/{n_a}")
        lhs = jnp.zeros((PAD_ROWS, c), jnp.float32)
        lhs = lhs.at[0:n_p, 0:in_p].set(feat_p.astype(jnp.float32))
        lhs = lhs.at[n_p:n_p + n_a, in_p:in_p + in_a].set(feat_a.astype(jnp.float32))
        lhs = lhs.at[0:n_p + n_a, c_bias].set(1.0)        # ones column -> bias fold
        out = call(lhs, rhs)
        # merge='cat' layout: head blocks already consecutive along lanes.
        return {"P": out[0:n_p, 0:hp],
                "A": out[n_p:n_p + n_a, hp:hp + ha]}

    return forward


# --------------------------------------------------------------------------- #
# Pure-JAX reference + synthetic parameters (sanity check only)
# --------------------------------------------------------------------------- #
def _reference(feat_p, feat_a, params, num_heads):
    def lrelu(x):
        return jnp.where(x > 0, x, L_ALPHA * x)

    outs_p, outs_a = [], []
    for h in range(num_heads):
        wh_p = feat_p @ params["w_p"][h] + params["b_p"][h]
        wh_a = feat_a @ params["w_a"][h] + params["b_a"][h]
        wh_p2p = feat_p @ params["w_p2p"][h] + params["b_p2p"][h]
        wh_p2a = feat_p @ params["w_p2a"][h] + params["b_p2a"][h]
        wh_a2p = feat_a @ params["w_a2p"][h] + params["b_a2p"][h]
        wh_a2a = feat_a @ params["w_a2a"][h] + params["b_a2a"][h]

        def softmax_agg(wh_src, wh_dst, a):
            s = wh_src @ a[0]
            d = wh_dst @ a[1]
            e = lrelu(d[:, None] + s[None, :])
            alpha = jax.nn.softmax(e, axis=1)
            return alpha @ wh_src

        agg_p2p = softmax_agg(wh_p2p, wh_p, params["a_p2p"][h])
        agg_p2a = softmax_agg(wh_p2a, wh_a, params["a_p2a"][h])
        agg_a2p = jnp.broadcast_to(wh_a2p, wh_p.shape)
        agg_a2a = wh_a2a
        outs_p.append(jax.nn.relu(wh_p + agg_p2p + agg_a2p))
        outs_a.append(jax.nn.relu(wh_a + agg_p2a + agg_a2a))
    return {"P": jnp.concatenate(outs_p, axis=1),
            "A": jnp.concatenate(outs_a, axis=1)}


def _make_params(key, num_heads, in_dim, out_dim):
    """Deterministic synthetic parameters (shapes per HeteroGATLayerReal.__init__)."""
    ks = jax.random.split(key, 16)
    in_p, in_a = in_dim["P"], in_dim["A"]
    d_p, d_a = out_dim["P"], out_dim["A"]

    def w(k, shape, scale=0.2):
        return (scale * jax.random.normal(k, shape)).astype(jnp.float32)

    return {
        "w_p":   w(ks[0],  (num_heads, in_p, d_p)),
        "b_p":   w(ks[1],  (num_heads, 1, d_p)),
        "w_a":   w(ks[2],  (num_heads, in_a, d_a)),
        "b_a":   w(ks[3],  (num_heads, 1, d_a)),
        "w_p2p": w(ks[4],  (num_heads, in_p, d_p)),
        "b_p2p": w(ks[5],  (num_heads, 1, d_p)),
        "w_p2a": w(ks[6],  (num_heads, in_p, d_a)),
        "b_p2a": w(ks[7],  (num_heads, 1, d_a)),
        "w_a2p": w(ks[8],  (num_heads, in_a, d_p)),
        "b_a2p": w(ks[9],  (num_heads, 1, d_p)),
        "w_a2a": w(ks[10], (num_heads, in_a, d_a)),
        "b_a2a": w(ks[11], (num_heads, 1, d_a)),
        # attn_fc_* weight (1, 2*d) split into (src_half, dst_half) rows: (2, d)
        "a_p2p": w(ks[12], (num_heads, 2, d_p)),
        "a_p2a": w(ks[13], (num_heads, 2, d_a)),
        "a_a2p": w(ks[14], (num_heads, 2, d_p)),   # unused in forward (single-edge softmax)
        "a_a2a": w(ks[15], (num_heads, 2, d_a)),   # unused in forward (single-edge softmax)
    }


if __name__ == "__main__":
    in_dim = {"P": 32, "A": 16}
    out_dim = {"P": 16, "A": 8}
    num_heads = 4

    key = jax.random.PRNGKey(0)
    k_fp, k_fa, k_par = jax.random.split(key, 3)
    feat_p = jax.random.normal(k_fp, (N_P, in_dim["P"]), dtype=jnp.float32)
    feat_a = jax.random.normal(k_fa, (N_A, in_dim["A"]), dtype=jnp.float32)
    params = _make_params(k_par, num_heads, in_dim, out_dim)

    # Parameter fusion done ONCE here (hoisted out of the per-forward path).
    forward = make_forward(params, num_heads)

    out = forward(feat_p, feat_a)
    out = jax.tree_util.tree_map(jax.block_until_ready, out)

    ref = _reference(feat_p, feat_a, params, num_heads)
    np.testing.assert_allclose(np.asarray(out["P"]), np.asarray(ref["P"]),
                               rtol=1e-2, atol=1e-2)
    np.testing.assert_allclose(np.asarray(out["A"]), np.asarray(ref["A"]),
                               rtol=1e-2, atol=1e-2)

    assert out["P"].shape == (N_P, num_heads * out_dim["P"])
    assert out["A"].shape == (N_A, num_heads * out_dim["A"])
    print("KERNEL_OK")
</pallas_src>

<mosaic_0001>
module attributes {stable_mosaic.version = 11 : i64} {
  func.func @_hetgat_fused_kernel(%arg0: memref<8x56xf32, #tpu.memory_space<vmem>>, %arg1: memref<56x640xf32, #tpu.memory_space<vmem>>, %arg2: memref<8x128xf32, #tpu.memory_space<vmem>>) attributes {dimension_semantics = [], scalar_prefetch = 0 : i64, scratch_operands = 0 : i64, tpu.core_type = #tpu.core_type<tc>} {
    %c0 = arith.constant 0 : index
    %c0_0 = arith.constant 0 : index
    %0 = vector.load %arg0[%c0, %c0_0] : memref<8x56xf32, #tpu.memory_space<vmem>>, vector<8x56xf32>
    %c0_1 = arith.constant 0 : index
    %c0_2 = arith.constant 0 : index
    %1 = vector.load %arg1[%c0_1, %c0_2] : memref<56x640xf32, #tpu.memory_space<vmem>>, vector<56x640xf32>
    %cst = arith.constant dense<0.000000e+00> : vector<8x640xf32>
    %2 = tpu.matmul %0, %1, %cst {dimension_numbers = #tpu.dot_dimension_numbers<[1], [0], [0], [1], [0, 0, 1, 1], [], []>} : vector<8x56xf32>, vector<56x640xf32>, vector<8x640xf32> -> vector<8x640xf32>
    %3 = vector.extract_strided_slice %2 {offsets = [0, 0], sizes = [8, 128], strides = [1, 1]} : vector<8x640xf32> to vector<8x128xf32>
    %4 = vector.extract_strided_slice %2 {offsets = [0, 128], sizes = [8, 128], strides = [1, 1]} : vector<8x640xf32> to vector<8x128xf32>
    %5 = vector.extract_strided_slice %2 {offsets = [0, 256], sizes = [8, 128], strides = [1, 1]} : vector<8x640xf32> to vector<8x128xf32>
    %6 = vector.extract_strided_slice %2 {offsets = [0, 384], sizes = [8, 128], strides = [1, 1]} : vector<8x640xf32> to vector<8x128xf32>
    %7 = vector.extract_strided_slice %2 {offsets = [0, 512], sizes = [8, 128], strides = [1, 1]} : vector<8x640xf32> to vector<8x128xf32>
    %8 = vector.extract_strided_slice %7 {offsets = [0, 0], sizes = [1, 128], strides = [1, 1]} : vector<8x128xf32> to vector<1x128xf32>
    %9 = vector.broadcast %8 : vector<1x128xf32> to vector<8x128xf32>
    %10 = arith.addf %6, %9 : vector<8x128xf32>
    %cst_3 = arith.constant 0.000000e+00 : f32
    %11 = vector.broadcast %cst_3 : f32 to vector<8x128xf32>
    %12 = arith.cmpf ogt, %10, %11 : vector<8x128xf32>
    %cst_4 = arith.constant 2.000000e-01 : f32
    %13 = vector.broadcast %cst_4 : f32 to vector<8x128xf32>
    %14 = arith.mulf %13, %10 : vector<8x128xf32>
    %15 = arith.select %12, %10, %14 : vector<8x128xi1>, vector<8x128xf32>
    %16 = vector.extract_strided_slice %7 {offsets = [1, 0], sizes = [1, 128], strides = [1, 1]} : vector<8x128xf32> to vector<1x128xf32>
    %17 = vector.broadcast %16 : vector<1x128xf32> to vector<8x128xf32>
    %18 = arith.addf %6, %17 : vector<8x128xf32>
    %cst_5 = arith.constant 0.000000e+00 : f32
    %19 = vector.broadcast %cst_5 : f32 to vector<8x128xf32>
    %20 = arith.cmpf ogt, %18, %19 : vector<8x128xf32>
    %cst_6 = arith.constant 2.000000e-01 : f32
    %21 = vector.broadcast %cst_6 : f32 to vector<8x128xf32>
    %22 = arith.mulf %21, %18 : vector<8x128xf32>
    %23 = arith.select %20, %18, %22 : vector<8x128xi1>, vector<8x128xf32>
    %24 = arith.subf %23, %15 : vector<8x128xf32>
    %25 = math.exp %24 : vector<8x128xf32>
    %cst_7 = arith.constant 1.000000e+00 : f32
    %26 = vector.broadcast %cst_7 : f32 to vector<8x128xf32>
    %27 = arith.addf %26, %25 : vector<8x128xf32>
    %28 = tpu.reciprocal %27 {approx = true} : vector<8x128xf32> -> vector<8x128xf32>
    %cst_8 = arith.constant 1.000000e+00 : f32
    %29 = vector.broadcast %cst_8 : f32 to vector<8x128xf32>
    %30 = arith.subf %29, %28 : vector<8x128xf32>
    %31 = vector.extract_strided_slice %4 {offsets = [0, 0], sizes = [1, 128], strides = [1, 1]} : vector<8x128xf32> to vector<1x128xf32>
    %32 = vector.broadcast %31 : vector<1x128xf32> to vector<8x128xf32>
    %33 = arith.mulf %28, %32 : vector<8x128xf32>
    %34 = vector.extract_strided_slice %4 {offsets = [1, 0], sizes = [1, 128], strides = [1, 1]} : vector<8x128xf32> to vector<1x128xf32>
    %35 = vector.broadcast %34 : vector<1x128xf32> to vector<8x128xf32>
    %36 = arith.mulf %30, %35 : vector<8x128xf32>
    %37 = arith.addf %33, %36 : vector<8x128xf32>
    %38 = vector.extract_strided_slice %5 {offsets = [2, 0], sizes = [1, 128], strides = [1, 1]} : vector<8x128xf32> to vector<1x128xf32>
    %39 = arith.addf %3, %37 : vector<8x128xf32>
    %40 = vector.broadcast %38 : vector<1x128xf32> to vector<8x128xf32>
    %41 = arith.addf %39, %40 : vector<8x128xf32>
    %cst_9 = arith.constant 0.000000e+00 : f32
    %42 = vector.broadcast %cst_9 : f32 to vector<8x128xf32>
    %43 = arith.maximumf %41, %42 : vector<8x128xf32>
    %c0_10 = arith.constant 0 : index
    %c0_11 = arith.constant 0 : index
    %44 = vector.load %arg2[%c0_10, %c0_11] : memref<8x128xf32, #tpu.memory_space<vmem>>, vector<8x128xf32>
    tpu.vector_store %arg2[%c0_10, %c0_11], %43 {strides = array<i32>} : memref<8x128xf32, #tpu.memory_space<vmem>>, vector<8x128xf32>,
    return
  }
}

</mosaic_0001>

<llo_original>
// kernel: forward.1
$region0: #{forward.1}
  #allocation0 [shape = 'u32[]', space=smem, size = 0x4, offset = 0x4, fixed_abs, tag = 'smem constant byte address 0x4 - core index']
  #allocation1 [shape = 'u32[144,128]{1,0:T(1,128)}', space=vmem, size = 0x12000, scoped, tag = 'internal scratch']
  %s0 = inlined_call_operand.vmem [shape: f32[8,56], index: 0, kind: input, shape index: {}]
  %s1 = inlined_call_operand.hbm [shape: f32[56,640], index: 1, kind: input, shape index: {}]
  %s2 = inlined_call_operand.vmem [shape: f32[8,128], index: 2, kind: output, shape index: {}]
  %s3 = sld [smem:[#allocation0]]
  $region22: #{forward.1} parent=0
    _
  %s5 = ssub.s32 1, %s3
  %s6 = scalar_select 0, %s5, %s3
  $region1: #{forward.1} parent=0
    #allocation2 [shape = 'u8[143360]{0}', space=vmem, size = 0x23000, scoped, tag = 'input window, operand 1, single buffered']
    #allocation3 [shape = 's32[1]{0}', space=sflag, size = 0x4, scoped, tag = 'scoped memory for forward.1']
    %7 = vsyncpa [#allocation3], 0
    // Predicated region
    $region2: #{forward.1} parent=1 // pred_check
      _
    $region3: #{forward.1} parent=1 // pred_check_branch
      %9 = sbr.rel (0) target = $region5
    $region4: #{forward.1} parent=1 // pred_region
      _
    $region5: #{forward.1} parent=1 // pred_fallthru
      _
    // Predicated region
    $region6: #{forward.1} parent=1 // pred_check
      _
    $region7: #{forward.1} parent=1 // pred_check_branch
      %11 = sbr.rel (0) target = $region9
    $region8: #{forward.1} parent=1 // pred_region
      %s13 = ssub.s32 4480, 4480
      %14 = vsyncadd [#allocation3], %s13
      %s15 = sshll.u32 [#allocation2], 4
      %s16 = int_to_ptr.vmem [resolvable:$true] %s15
      %21 = dma.hbm_to_vmem [thread:$0]  %s1, 4480, %s16, [#allocation3], 640, 640, 40
    $region9: #{forward.1} parent=1 // pred_fallthru
      _
    // Predicated region
    $region10: #{forward.1} parent=1 // pred_check
      _
    $region11: #{forward.1} parent=1 // pred_check_branch
      %23 = sbr.rel (0) target = $region13
    $region12: #{forward.1} parent=1 // pred_region
      %24 = dma.done [#allocation3], 4480
    $region13: #{forward.1} parent=1 // pred_fallthru
      _
    %v25 = vld [vmem:[%s0] sm:$0xff]
    %v26 = vld [vmem:[#allocation2] sm:$0xff]
    %v27 = vld [vmem:[#allocation2 + $0x8] sm:$0xff]
    %v28 = vld [vmem:[#allocation2 + $0x10] sm:$0xff]
    %v29 = vld [vmem:[#allocation2 + $0x18] sm:$0xff]
    %v30 = vld [vmem:[#allocation2 + $0x20] sm:$0xff]
    %v31 = vld [vmem:[#allocation2 + $0x28] sm:$0xff]
    %v32 = vld [vmem:[#allocation2 + $0x30] sm:$0xff]
    %v33 = vld [vmem:[#allocation2 + $0x38] sm:$0xff]
    %v34 = vld [vmem:[#allocation2 + $0x40] sm:$0xff]
    %v35 = vld [vmem:[#allocation2 + $0x48] sm:$0xff]
    %v36 = vld [vmem:[#allocation2 + $0x50] sm:$0xff]
    %v37 = vld [vmem:[#allocation2 + $0x58] sm:$0xff]
    %v38 = vld [vmem:[#allocation2 + $0x60] sm:$0xff]
    %v39 = vld [vmem:[#allocation2 + $0x68] sm:$0xff]
    %v40 = vld [vmem:[#allocation2 + $0x70] sm:$0xff]
    %v41 = vld [vmem:[#allocation2 + $0x78] sm:$0xff]
    %v42 = vld [vmem:[#allocation2 + $0x80] sm:$0xff]
    %v43 = vld [vmem:[#allocation2 + $0x88] sm:$0xff]
    %v44 = vld [vmem:[#allocation2 + $0x90] sm:$0xff]
    %v45 = vld [vmem:[#allocation2 + $0x98] sm:$0xff]
    %v46 = vld [vmem:[#allocation2 + $0xa0] sm:$0xff]
    %v47 = vld [vmem:[#allocation2 + $0xa8] sm:$0xff]
    %v48 = vld [vmem:[#allocation2 + $0xb0] sm:$0xff]
    %v49 = vld [vmem:[#allocation2 + $0xb8] sm:$0xff]
    %v50 = vld [vmem:[#allocation2 + $0xc0] sm:$0xff]
    %v51 = vld [vmem:[#allocation2 + $0xc8] sm:$0xff]
    %v52 = vld [vmem:[#allocation2 + $0xd0] sm:$0xff]
    %v53 = vld [vmem:[#allocation2 + $0xd8] sm:$0xff]
    %v54 = vld [vmem:[#allocation2 + $0xe0] sm:$0xff]
    %v55 = vld [vmem:[#allocation2 + $0xe8] sm:$0xff]
    %v56 = vld [vmem:[#allocation2 + $0xf0] sm:$0xff]
    %v57 = vld [vmem:[#allocation2 + $0xf8] sm:$0xff]
    %v58 = vld [vmem:[#allocation2 + $0x100] sm:$0xff]
    %v59 = vld [vmem:[#allocation2 + $0x108] sm:$0xff]
    %v60 = vld [vmem:[#allocation2 + $0x110] sm:$0xff]
    %vm61 = vcmask 457728
    %v63 = vsel %vm61, %v25, 0
    %65 = vmatprep.subr.mxu0 %v27
    %66 = vmatpush1.msra.mxu0 %v26
    %67 = vmatprep.subr.mxu0 %v32
    %68 = vmatpush1.msra.mxu0 %v31
    %69 = vmatprep.subr.mxu0 %v37
    %70 = vmatpush1.msra.mxu0 %v36
    %71 = vmatprep.subr.mxu0 %v42
    %72 = vmatpush1.msra.mxu0 %v41
    %73 = vmatprep.subr.mxu0 %v47
    %74 = vmatpush1.msra.mxu0 %v46
    %75 = vmatprep.subr.mxu0 %v52
    %76 = vmatpush1.msra.mxu0 %v51
    %77 = vmatprep.subr.mxu0 %v57
    %78 = vmatpush1.msra.mxu0 %v56
    %79 = vmatprep.subr.mxu0 0.0
    %80 = vmatpush1.msra.mxu0 0.0
    %81 = vmatprep.subr.mxu0 0.0
    %82 = vmatpush1.msra.mxu0 0.0
    %83 = vmatprep.subr.mxu0 0.0
    %84 = vmatpush1.msra.mxu0 0.0
    %85 = vmatprep.subr.mxu0 0.0
    %86 = vmatpush1.msra.mxu0 0.0
    %87 = vmatprep.subr.mxu0 0.0
    %88 = vmatpush1.msra.mxu0 0.0
    %89 = vmatprep.subr.mxu0 0.0
    %90 = vmatpush1.msra.mxu0 0.0
    %91 = vmatprep.subr.mxu0 0.0
    %92 = vmatpush1.msra.mxu0 0.0
    %93 = vmatprep.subr.mxu0 0.0
    %94 = vmatpush1.msra.mxu0 0.0
    %95 = vmatprep.subr.mxu0 0.0
    %96 = vmatpush1.msra.mxu0 0.0
    %97 = vmatprep.subr.mxu0 0.0
    %98 = vmatpush1.msra.mxu0 0.0
    %99 = vmatprep.subr.mxu0 0.0
    %100 = vmatpush1.msra.mxu0 0.0
    %101 = vmatprep.subr.mxu0 0.0
    %102 = vmatpush1.msra.mxu0 0.0
    %103 = vmatprep.subr.mxu0 0.0
    %104 = vmatpush1.msra.mxu0 0.0
    %105 = vmatprep.subr.mxu0 0.0
    %106 = vmatpush1.msra.mxu0 0.0
    %107 = vmatprep.subr.mxu0 0.0
    %108 = vmatpush1.msra.mxu0 0.0
    %109 = vmatprep.subr.mxu0 0.0
    %110 = vmatpush1.msra.mxu0 0.0
    %111 = vmatprep.subr.mxu0 0.0
    %112 = vmatpush1.msra.mxu0 0.0
    %113 = vmatprep.subr.mxu0 0.0
    %114 = vmatpush1.msra.mxu0 0.0
    %115 = vmatprep.subr.mxu0 0.0
    %116 = vmatpush1.msra.mxu0 0.0
    %117 = vmatprep.subr.mxu0 0.0
    %118 = vmatpush1.msra.mxu0 0.0
    %119 = vmatprep.subr.mxu0 0.0
    %120 = vmatpush1.msra.mxu0 0.0
    %121 = vmatprep.subr.mxu0 0.0
    %122 = vmatpush1.msra.mxu0 0.0
    %123 = vmatprep.subr.mxu0 0.0
    %124 = vmatpush1.msra.mxu0 0.0
    %125 = vmatprep.subr.mxu0 0.0
    %126 = vmatpush1.msra.mxu0 0.0
    %127 = vmatprep.subr.mxu0 0.0
    %128 = vmatpush1.msra.mxu0 0.0
    %129 = vmatprep.mubr.f32.mxu0 0.0
    %130 = vmatmul.mubr.f32.gmra.mrb[0].mxu0 %v63
    %v131 = vpop.f32.mrb[0].mxu0
    %v132 = vadd.f32 0.0, %v131
    %v133 = vpop.f32.mrb[0].mxu0
    %v134 = vadd.f32 0.0, %v133
    %135 = vdwg.mxu0
    %136 = vmatprep.subr.mxu0 %v29
    %137 = vmatpush1.msra.mxu0 %v28
    %138 = vmatprep.subr.mxu0 %v34
    %139 = vmatpush1.msra.mxu0 %v33
    %140 = vmatprep.subr.mxu0 %v39
    %141 = vmatpush1.msra.mxu0 %v38
    %142 = vmatprep.subr.mxu0 %v44
    %143 = vmatpush1.msra.mxu0 %v43
    %144 = vmatprep.subr.mxu0 %v49
    %145 = vmatpush1.msra.mxu0 %v48
    %146 = vmatprep.subr.mxu0 %v54
    %147 = vmatpush1.msra.mxu0 %v53
    %148 = vmatprep.subr.mxu0 %v59
    %149 = vmatpush1.msra.mxu0 %v58
    %150 = vmatprep.subr.mxu0 0.0
    %151 = vmatpush1.msra.mxu0 0.0
    %152 = vmatprep.subr.mxu0 0.0
    %153 = vmatpush1.msra.mxu0 0.0
    %154 = vmatprep.subr.mxu0 0.0
    %155 = vmatpush1.msra.mxu0 0.0
    %156 = vmatprep.subr.mxu0 0.0
    %157 = vmatpush1.msra.mxu0 0.0
    %158 = vmatprep.subr.mxu0 0.0
    %159 = vmatpush1.msra.mxu0 0.0
    %160 = vmatprep.subr.mxu0 0.0
    %161 = vmatpush1.msra.mxu0 0.0
    %162 = vmatprep.subr.mxu0 0.0
    %163 = vmatpush1.msra.mxu0 0.0
    %164 = vmatprep.subr.mxu0 0.0
    %165 = vmatpush1.msra.mxu0 0.0
    %166 = vmatprep.subr.mxu0 0.0
    %167 = vmatpush1.msra.mxu0 0.0
    %168 = vmatprep.subr.mxu0 0.0
    %169 = vmatpush1.msra.mxu0 0.0
    %170 = vmatprep.subr.mxu0 0.0
    %171 = vmatpush1.msra.mxu0 0.0
    %172 = vmatprep.subr.mxu0 0.0
    %173 = vmatpush1.msra.mxu0 0.0
    %174 = vmatprep.subr.mxu0 0.0
    %175 = vmatpush1.msra.mxu0 0.0
    %176 = vmatprep.subr.mxu0 0.0
    %177 = vmatpush1.msra.mxu0 0.0
    %178 = vmatprep.subr.mxu0 0.0
    %179 = vmatpush1.msra.mxu0 0.0
    %180 = vmatprep.subr.mxu0 0.0
    %181 = vmatpush1.msra.mxu0 0.0
    %182 = vmatprep.subr.mxu0 0.0
    %183 = vmatpush1.msra.mxu0 0.0
    %184 = vmatprep.subr.mxu0 0.0
    %185 = vmatpush1.msra.mxu0 0.0
    %186 = vmatprep.subr.mxu0 0.0
    %187 = vmatpush1.msra.mxu0 0.0
    %188 = vmatprep.subr.mxu0 0.0
    %189 = vmatpush1.msra.mxu0 0.0
    %190 = vmatprep.subr.mxu0 0.0
    %191 = vmatpush1.msra.mxu0 0.0
    %192 = vmatprep.subr.mxu0 0.0
    %193 = vmatpush1.msra.mxu0 0.0
    %194 = vmatprep.subr.mxu0 0.0
    %195 = vmatpush1.msra.mxu0 0.0
    %196 = vmatprep.subr.mxu0 0.0
    %197 = vmatpush1.msra.mxu0 0.0
    %198 = vmatprep.subr.mxu0 0.0
    %199 = vmatpush1.msra.mxu0 0.0
    %200 = vmatprep.mubr.f32.mxu0 0.0
    %201 = vmatmul.mubr.f32.gmra.mrb[0].mxu0 %v63
    %v202 = vpop.f32.mrb[0].mxu0
    %v203 = vadd.f32 0.0, %v202
    %v204 = vpop.f32.mrb[0].mxu0
    %v205 = vadd.f32 0.0, %v204
    %206 = vdwg.mxu0
    %207 = vmatprep.subr.mxu0 0.0
    %208 = vmatpush1.msra.mxu0 %v30
    %209 = vmatprep.subr.mxu0 0.0
    %210 = vmatpush1.msra.mxu0 %v35
    %211 = vmatprep.subr.mxu0 0.0
    %212 = vmatpush1.msra.mxu0 %v40
    %213 = vmatprep.subr.mxu0 0.0
    %214 = vmatpush1.msra.mxu0 %v45
    %215 = vmatprep.subr.mxu0 0.0
    %216 = vmatpush1.msra.mxu0 %v50
    %217 = vmatprep.subr.mxu0 0.0
    %218 = vmatpush1.msra.mxu0 %v55
    %219 = vmatprep.subr.mxu0 0.0
    %220 = vmatpush1.msra.mxu0 %v60
    %221 = vmatprep.subr.mxu0 0.0
    %222 = vmatpush1.msra.mxu0 0.0
    %223 = vmatprep.subr.mxu0 0.0
    %224 = vmatpush1.msra.mxu0 0.0
    %225 = vmatprep.subr.mxu0 0.0
    %226 = vmatpush1.msra.mxu0 0.0
    %227 = vmatprep.subr.mxu0 0.0
    %228 = vmatpush1.msra.mxu0 0.0
    %229 = vmatprep.subr.mxu0 0.0
    %230 = vmatpush1.msra.mxu0 0.0
    %231 = vmatprep.subr.mxu0 0.0
    %232 = vmatpush1.msra.mxu0 0.0
    %233 = vmatprep.subr.mxu0 0.0
    %234 = vmatpush1.msra.mxu0 0.0
    %235 = vmatprep.subr.mxu0 0.0
    %236 = vmatpush1.msra.mxu0 0.0
    %237 = vmatprep.subr.mxu0 0.0
    %238 = vmatpush1.msra.mxu0 0.0
    %239 = vmatprep.subr.mxu0 0.0
    %240 = vmatpush1.msra.mxu0 0.0
    %241 = vmatprep.subr.mxu0 0.0
    %242 = vmatpush1.msra.mxu0 0.0
    %243 = vmatprep.subr.mxu0 0.0
    %244 = vmatpush1.msra.mxu0 0.0
    %245 = vmatprep.subr.mxu0 0.0
    %246 = vmatpush1.msra.mxu0 0.0
    %247 = vmatprep.subr.mxu0 0.0
    %248 = vmatpush1.msra.mxu0 0.0
    %249 = vmatprep.subr.mxu0 0.0
    %250 = vmatpush1.msra.mxu0 0.0
    %251 = vmatprep.subr.mxu0 0.0
    %252 = vmatpush1.msra.mxu0 0.0
    %253 = vmatprep.subr.mxu0 0.0
    %254 = vmatpush1.msra.mxu0 0.0
    %255 = vmatprep.subr.mxu0 0.0
    %256 = vmatpush1.msra.mxu0 0.0
    %257 = vmatprep.subr.mxu0 0.0
    %258 = vmatpush1.msra.mxu0 0.0
    %259 = vmatprep.subr.mxu0 0.0
    %260 = vmatpush1.msra.mxu0 0.0
    %261 = vmatprep.subr.mxu0 0.0
    %262 = vmatpush1.msra.mxu0 0.0
    %263 = vmatprep.subr.mxu0 0.0
    %264 = vmatpush1.msra.mxu0 0.0
    %265 = vmatprep.subr.mxu0 0.0
    %266 = vmatpush1.msra.mxu0 0.0
    %267 = vmatprep.subr.mxu0 0.0
    %268 = vmatpush1.msra.mxu0 0.0
    %269 = vmatprep.subr.mxu0 0.0
    %270 = vmatpush1.msra.mxu0 0.0
    %271 = vmatprep.mubr.f32.mxu0 0.0
    %272 = vmatmul.mubr.f32.gmra.mrb[0].mxu0 %v63
    %v273 = vpop.f32.mrb[0].mxu0
    %v274 = vadd.f32 0.0, %v273
    %v275 = vpop.f32.mrb[0].mxu0
    %276 = vdwg.mxu0
    %v277 = vlaneseq
    %v278 = vshrl.u32 %v277, 7
    %v279 = vsub.s32 0, %v278
    %v280 = vrot.slane %v274, %v279
    %v281 = vadd.f32 %v205, %v280
    %vm282 = vcmp.gt.f32.partialorder %v281, 0.0
    %v283 = vmul.f32 %v281, 0.2
    %v284 = vsel %vm282, %v281, %v283
    %v285 = vlaneseq
    %v286 = vshrl.u32 %v285, 7
    %v287 = vsub.s32 1, %v286
    %v288 = vrot.slane %v274, %v287
    %v289 = vadd.f32 %v205, %v288
    %vm290 = vcmp.gt.f32.partialorder %v289, 0.0
    %v291 = vmul.f32 %v289, 0.2
    %v292 = vsel %vm290, %v289, %v291
    %v293 = vsub.f32 %v292, %v284
    %v294 = vmul.f32 %v293, 1.442695
    %v295 = vpow.pop %v294
    %v296 = vadd.f32 %v295, 1.0
    %v297 = vrcp.pop %v296
    %v298 = vsub.f32 1.0, %v297
    %v299 = vlaneseq
    %v300 = vshrl.u32 %v299, 7
    %v301 = vsub.s32 0, %v300
    %v302 = vrot.slane %v134, %v301
    %v303 = vmul.f32 %v297, %v302
    %v304 = vlaneseq
    %v305 = vshrl.u32 %v304, 7
    %v306 = vsub.s32 1, %v305
    %v307 = vrot.slane %v134, %v306
    %v308 = vmul.f32 %v298, %v307
    %v309 = vadd.f32 %v303, %v308
    %v310 = vadd.f32 %v132, %v309
    %v311 = vlaneseq
    %v312 = vshrl.u32 %v311, 7
    %v313 = vsub.s32 2, %v312
    %v314 = vrot.slane %v203, %v313
    %v315 = vadd.f32 %v310, %v314
    %v316 = vmax.f32 %v315, 0.0
    %317 = vst [vmem:[%s2] sm:$0xff] %v316
    // Predicated region
    $region14: #{forward.1} parent=1 // pred_check
      _
    $region15: #{forward.1} parent=1 // pred_check_branch
      %319 = sbr.rel (0) target = $region17
    $region16: #{forward.1} parent=1 // pred_region
      _
    $region17: #{forward.1} parent=1 // pred_fallthru
      _
    // Predicated region
    $region18: #{forward.1} parent=1 // pred_check
      _
    $region19: #{forward.1} parent=1 // pred_check_branch
      %321 = sbr.rel (0) target = $region21
    $region20: #{forward.1} parent=1 // pred_region
      _
    $region21: #{forward.1} parent=1 // pred_fallthru
      _
    %322 = vsyncpa [#allocation3], 1

</llo_original>
